<compile_context>
chip_gen: v6e
topology: v6e:2x2x1
jax: 0.10.0
libtpu: 0.0.40
codegen_flags: <defaults>
</compile_context>

<pallas_src>
import functools
import math

import jax
import jax.numpy as jnp
from jax import lax
from jax.experimental import pallas as pl
from jax.experimental.pallas import tpu as pltpu


def _round_up(a, b):
    return -(-a // b) * b


def _cdiv(a, b):
    return -(-a // b)


# ---------------------------------------------------------------------------
# Kernel
# ---------------------------------------------------------------------------
def _ffn_ln_kernel(x_ref, w1_ref, b1_ref, w2_ref, b2_ref, gamma_ref, beta_ref,
                   o_ref, acc_ref, xm_ref, *, eps, d_model, d_padded):
    k = pl.program_id(1)
    nk = pl.num_programs(1)

    @pl.when(k == 0)
    def _():
        acc_ref[...] = jnp.zeros_like(acc_ref)
        # Cast x to the matmul operand dtype once per row tile (reused across all k).
        xm_ref[...] = x_ref[...].astype(xm_ref.dtype)

    # conv1 (kernel_size=1) chunk: d_model -> tile_ff, bias + ReLU (exact per-chunk).
    h = jnp.dot(xm_ref[...], w1_ref[...], preferred_element_type=jnp.float32)
    h = jnp.maximum(h + b1_ref[...], 0.0)

    # conv2 (kernel_size=1) chunk: tile_ff -> d_model, f32 accumulation in VMEM scratch.
    acc_ref[...] += jnp.dot(h.astype(w2_ref.dtype), w2_ref[...],
                            preferred_element_type=jnp.float32)

    @pl.when(k == nk - 1)
    def _():
        y = acc_ref[...] + b2_ref[...]
        z = x_ref[...].astype(jnp.float32) + y          # residual add (f32)

        # Padded lanes of z are exactly zero (x, W2 columns and b2 are zero-padded),
        # so the mean needs no mask; only `diff` needs masking (and only if padded).
        mean = jnp.sum(z, axis=-1, keepdims=True) * (1.0 / d_model)
        diff = z - mean
        if d_padded != d_model:
            lane = lax.broadcasted_iota(jnp.int32, z.shape, 1)
            diff = jnp.where(lane < d_model, diff, 0.0)

        # Unbiased std (torch.std default) and eps added to std — matches the module.
        denom_n = d_model - 1 if d_model > 1 else 1
        var_unbiased = jnp.sum(diff * diff, axis=-1, keepdims=True) * (1.0 / denom_n)
        denom = jnp.sqrt(var_unbiased) + eps

        # EUP approx reciprocal + 2 Newton refinements (divide off the VPU, ~f32 exact).
        r = pl.reciprocal(denom, approx=True)
        r = r * (2.0 - denom * r)
        r = r * (2.0 - denom * r)

        out = gamma_ref[...] * (diff * r) + beta_ref[...]
        o_ref[...] = out.astype(o_ref.dtype)


# ---------------------------------------------------------------------------
# Tiling planner
# ---------------------------------------------------------------------------
def _vmem_budget_bytes():
    cap = 128 << 20
    try:
        info = pltpu.get_tpu_info()
        cap = int(getattr(info, "vmem_capacity_bytes", cap) or cap)
    except Exception:
        pass
    # Leave compiler headroom: ~48 MiB usable on v7x (64 MiB), ~100 MiB on v5e/v6e.
    return max(16 << 20, min(int(cap * 0.80), cap - (16 << 20)))


def _footprint_bytes(tm, d_mp, tile_ff, xbytes, obytes, wbytes):
    return (2 * tm * d_mp * xbytes                 # x tile (double-buffered)
            + 2 * tm * d_mp * obytes               # out tile
            + 2 * d_mp * tile_ff * wbytes          # W1 tile
            + 2 * tile_ff * d_mp * wbytes          # W2 tile
            + 2 * tile_ff * 4                      # b1 tile
            + 3 * 2 * d_mp * 4                     # b2 / gamma / beta
            + tm * d_mp * 4                        # f32 accumulator scratch
            + tm * d_mp * wbytes                   # xm scratch (matmul dtype)
            + tm * tile_ff * (4 + wbytes))         # h intermediate (f32) + its cast


def _plan_ff(d_mp, d_ffp0, wbytes, budget, tile_m, lane_multiple):
    """Pick (tm, tile_ff, n_ff): weight-resident (n_ff==1) first, then large tm."""
    tm_cands = sorted({max(8, _round_up(t, 8))
                       for t in (tile_m, 1024, 768, 512, 384, 256, 128, 64, 32, 16, 8)},
                      reverse=True)
    max_chunks = max(1, d_ffp0 // lane_multiple)
    for n_ff in range(1, max_chunks + 1):
        tile_ff = _round_up(_cdiv(d_ffp0, n_ff), lane_multiple)
        for tm in tm_cands:
            if _footprint_bytes(tm, d_mp, tile_ff, 4, 4, wbytes) <= budget:
                return tm, tile_ff, n_ff
    return 8, lane_multiple, max_chunks


# ---------------------------------------------------------------------------
# Wrapper: pad/cast params once, return apply(x)
# ---------------------------------------------------------------------------
def make_poswise_ffn(w1, b1, w2, b2, gamma, beta, *, eps=1e-6, tile_m=512,
                     matmul_dtype=jnp.bfloat16, lane_multiple=128):
    """w1: (d_model, d_ff), w2: (d_ff, d_model). Returns apply(x) with x: (B, S, d_model)."""
    d_model, d_ff = w1.shape
    f32 = jnp.float32
    wbytes = jnp.dtype(matmul_dtype).itemsize

    d_mp = _round_up(d_model, lane_multiple)
    d_ffp0 = _round_up(d_ff, lane_multiple)
    budget = _vmem_budget_bytes()

    tm_plan, tile_ff, n_ff = _plan_ff(d_mp, d_ffp0, wbytes, budget, tile_m, lane_multiple)
    d_ffp = tile_ff * n_ff

    # --- one-time padding + cast of the parameters (hoisted out of the call path) ---
    w1p = jnp.zeros((d_mp, d_ffp), matmul_dtype).at[:d_model, :d_ff].set(w1.astype(matmul_dtype))
    w2p = jnp.zeros((d_ffp, d_mp), matmul_dtype).at[:d_ff, :d_model].set(w2.astype(matmul_dtype))
    b1p = jnp.zeros((1, d_ffp), f32).at[0, :d_ff].set(b1.astype(f32))
    b2p = jnp.zeros((1, d_mp), f32).at[0, :d_model].set(b2.astype(f32))
    gp = jnp.zeros((1, d_mp), f32).at[0, :d_model].set(gamma.astype(f32))
    bp = jnp.zeros((1, d_mp), f32).at[0, :d_model].set(beta.astype(f32))

    kernel = functools.partial(_ffn_ln_kernel, eps=eps, d_model=d_model, d_padded=d_mp)

    def apply(x):
        B, S, dm = x.shape
        assert dm == d_model, "x last dim must equal d_model"
        N = B * S
        xbytes = jnp.dtype(x.dtype).itemsize

        rows = _round_up(N, 8)
        tm = max(8, min(tm_plan, rows))
        # Keep >= 2 row tiles so both v7x TensorCores get work on the 'parallel' axis.
        if _cdiv(rows, tm) < 2 and rows > 8:
            tm = _round_up(_cdiv(rows, 2), 8)
        n_pad = _round_up(N, tm)
        n_row_tiles = n_pad // tm

        x_flat = x.reshape(N, d_model)
        need_pad = (n_pad != N) or (d_mp != d_model)
        if need_pad:
            x2 = jnp.zeros((n_pad, d_mp), x.dtype).at[:N, :d_model].set(x_flat)
        else:
            x2 = x_flat

        est = _footprint_bytes(tm, d_mp, tile_ff, xbytes, xbytes, wbytes)
        vmem_limit = int(max(16 << 20, min(budget, est + (8 << 20))))

        weight_reads = 1 if n_ff == 1 else n_row_tiles   # resident weights read once
        cost = pl.CostEstimate(
            flops=int(4 * N * d_model * d_ff),            # two matmuls, 2 flops / MAC
            transcendentals=int(2 * N),                   # sqrt + reciprocal per row
            bytes_accessed=int(2 * N * d_model * xbytes
                               + weight_reads * 2 * d_mp * d_ffp * wbytes),
        )

        out2 = pl.pallas_call(
            kernel,
            out_shape=jax.ShapeDtypeStruct((n_pad, d_mp), x.dtype),
            grid_spec=pltpu.PrefetchScalarGridSpec(
                num_scalar_prefetch=0,
                grid=(n_row_tiles, n_ff),
                in_specs=[
                    pl.BlockSpec((tm, d_mp), lambda i, k: (i, 0)),        # x rows
                    pl.BlockSpec((d_mp, tile_ff), lambda i, k: (0, k)),   # W1 chunk
                    pl.BlockSpec((1, tile_ff), lambda i, k: (0, k)),      # b1 chunk
                    pl.BlockSpec((tile_ff, d_mp), lambda i, k: (k, 0)),   # W2 chunk
                    pl.BlockSpec((1, d_mp), lambda i, k: (0, 0)),         # b2
                    pl.BlockSpec((1, d_mp), lambda i, k: (0, 0)),         # gamma
                    pl.BlockSpec((1, d_mp), lambda i, k: (0, 0)),         # beta
                ],
                out_specs=pl.BlockSpec((tm, d_mp), lambda i, k: (i, 0)),
                scratch_shapes=[pltpu.VMEM((tm, d_mp), jnp.float32),      # f32 accumulator
                                pltpu.VMEM((tm, d_mp), matmul_dtype)],    # cast-once x tile
            ),
            compiler_params=pltpu.CompilerParams(
                dimension_semantics=("parallel", "arbitrary"),
                vmem_limit_bytes=vmem_limit),
            cost_estimate=cost,
        )(x2, w1p, b1p, w2p, b2p, gp, bp)

        if need_pad:
            out2 = out2[:N, :d_model]
        return out2.reshape(B, S, d_model)

    return apply


def poswise_ffn(x, w1, b1, w2, b2, gamma, beta, *, eps=1e-6, tile_m=512,
                matmul_dtype=jnp.bfloat16):
    """Convenience one-shot wrapper (prefer make_poswise_ffn + apply in real use)."""
    return make_poswise_ffn(w1, b1, w2, b2, gamma, beta, eps=eps, tile_m=tile_m,
                            matmul_dtype=matmul_dtype)(x)


def _reference(x, w1, b1, w2, b2, gamma, beta, eps=1e-6):
    """Pure-JAX reference mirroring the PyTorch module (eval mode, f32)."""
    h = jnp.maximum(jnp.einsum("bsd,df->bsf", x, w1) + b1, 0.0)
    y = jnp.einsum("bsf,fd->bsd", h, w2) + b2
    z = x + y
    mean = jnp.mean(z, axis=-1, keepdims=True)
    d = z.shape[-1]
    std = jnp.sqrt(jnp.sum((z - mean) ** 2, axis=-1, keepdims=True) / (d - 1))
    return gamma * (z - mean) / (std + eps) + beta


if __name__ == "__main__":
    B, S = 2, 8
    d_model, d_ff = 32, 64

    key = jax.random.PRNGKey(0)
    kx, k1, kb1, k2, kb2 = jax.random.split(key, 5)

    x = jax.random.normal(kx, (B, S, d_model), dtype=jnp.float32)

    # conv1: weight (d_ff, d_model, 1) -> stored transposed as (d_model, d_ff)
    bound1 = 1.0 / math.sqrt(d_model)
    w1 = jax.random.uniform(k1, (d_model, d_ff), jnp.float32, -bound1, bound1)
    b1 = jax.random.uniform(kb1, (d_ff,), jnp.float32, -bound1, bound1)

    # conv2: weight (d_model, d_ff, 1) -> stored transposed as (d_ff, d_model)
    bound2 = 1.0 / math.sqrt(d_ff)
    w2 = jax.random.uniform(k2, (d_ff, d_model), jnp.float32, -bound2, bound2)
    b2 = jax.random.uniform(kb2, (d_model,), jnp.float32, -bound2, bound2)

    gamma = jnp.ones((d_model,), jnp.float32)
    beta = jnp.zeros((d_model,), jnp.float32)

    ref = _reference(x, w1, b1, w2, b2, gamma, beta)

    # 1) f32 matmul path: tight check against the f32 reference.
    ffn_f32 = make_poswise_ffn(w1, b1, w2, b2, gamma, beta, matmul_dtype=jnp.float32)
    out_f32 = jax.block_until_ready(ffn_f32(x))
    assert out_f32.shape == (B, S, d_model)
    assert jnp.allclose(out_f32, ref, atol=1e-4, rtol=1e-4), "f32 path mismatch vs reference"

    # 2) bf16 matmul path (recommended production config): looser tolerance because
    #    weight/activation operands are rounded to bf16 (accumulation + LN stay f32).
    ffn_bf16 = make_poswise_ffn(w1, b1, w2, b2, gamma, beta, matmul_dtype=jnp.bfloat16)
    out_bf16 = jax.block_until_ready(ffn_bf16(x))
    assert out_bf16.shape == (B, S, d_model)
    assert jnp.allclose(out_bf16, ref, atol=5e-2, rtol=5e-2), "bf16 path mismatch vs reference"

    print("KERNEL_OK")
</pallas_src>

<mosaic_0001>
module attributes {stable_mosaic.version = 11 : i64} {
  func.func @_ffn_ln_kernel(%arg0: i32, %arg1: i32, %arg2: memref<8x128xf32, #tpu.memory_space<vmem>>, %arg3: memref<128x128xf32, #tpu.memory_space<vmem>>, %arg4: memref<1x128xf32, #tpu.memory_space<vmem>>, %arg5: memref<128x128xf32, #tpu.memory_space<vmem>>, %arg6: memref<1x128xf32, #tpu.memory_space<vmem>>, %arg7: memref<1x128xf32, #tpu.memory_space<vmem>>, %arg8: memref<1x128xf32, #tpu.memory_space<vmem>>, %arg9: memref<8x128xf32, #tpu.memory_space<vmem>>, %arg10: memref<8x128xf32, #tpu.memory_space<vmem>>, %arg11: memref<8x128xf32, #tpu.memory_space<vmem>>) attributes {dimension_semantics = [#tpu.dimension_semantics<parallel>, #tpu.dimension_semantics<arbitrary>], iteration_bounds = array<i64: 2, 1>, scalar_prefetch = 0 : i64, scratch_operands = 2 : i64, tpu.core_type = #tpu.core_type<tc>, window_params = [{transform_indices = @transform_0, window_bounds = array<i64: 8, 128>}, {transform_indices = @transform_1, window_bounds = array<i64: 128, 128>}, {transform_indices = @transform_2, window_bounds = array<i64: 1, 128>}, {transform_indices = @transform_3, window_bounds = array<i64: 128, 128>}, {pipeline_mode = #tpu.pipeline_mode<synchronous>, transform_indices = @transform_4, window_bounds = array<i64: 1, 128>}, {pipeline_mode = #tpu.pipeline_mode<synchronous>, transform_indices = @transform_5, window_bounds = array<i64: 1, 128>}, {pipeline_mode = #tpu.pipeline_mode<synchronous>, transform_indices = @transform_6, window_bounds = array<i64: 1, 128>}, {transform_indices = @transform_7, window_bounds = array<i64: 8, 128>}]} {
    %c0_i32 = arith.constant 0 : i32
    %0 = arith.cmpi eq, %arg1, %c0_i32 : i32
    %1 = arith.extui %0 : i1 to i32
    %c0_i32_0 = arith.constant 0 : i32
    %2 = arith.cmpi ne, %1, %c0_i32_0 : i32
    scf.if %2 {
      %cst_16 = arith.constant 0.000000e+00 : f32
      %19 = vector.broadcast %cst_16 : f32 to vector<8x128xf32>
      %c0_17 = arith.constant 0 : index
      %c0_18 = arith.constant 0 : index
      %20 = vector.load %arg10[%c0_17, %c0_18] : memref<8x128xf32, #tpu.memory_space<vmem>>, vector<8x128xf32>
      tpu.vector_store %arg10[%c0_17, %c0_18], %19 {strides = array<i32>} : memref<8x128xf32, #tpu.memory_space<vmem>>, vector<8x128xf32>,
      %c0_19 = arith.constant 0 : index
      %c0_20 = arith.constant 0 : index
      %21 = vector.load %arg2[%c0_19, %c0_20] : memref<8x128xf32, #tpu.memory_space<vmem>>, vector<8x128xf32>
      %c0_21 = arith.constant 0 : index
      %c0_22 = arith.constant 0 : index
      %22 = vector.load %arg11[%c0_21, %c0_22] : memref<8x128xf32, #tpu.memory_space<vmem>>, vector<8x128xf32>
      tpu.vector_store %arg11[%c0_21, %c0_22], %21 {strides = array<i32>} : memref<8x128xf32, #tpu.memory_space<vmem>>, vector<8x128xf32>,
    } else {
    }
    %c0 = arith.constant 0 : index
    %c0_1 = arith.constant 0 : index
    %3 = vector.load %arg11[%c0, %c0_1] : memref<8x128xf32, #tpu.memory_space<vmem>>, vector<8x128xf32>
    %c0_2 = arith.constant 0 : index
    %c0_3 = arith.constant 0 : index
    %4 = vector.load %arg3[%c0_2, %c0_3] : memref<128x128xf32, #tpu.memory_space<vmem>>, vector<128x128xf32>
    %cst = arith.constant dense<0.000000e+00> : vector<8x128xf32>
    %5 = tpu.matmul %3, %4, %cst {dimension_numbers = #tpu.dot_dimension_numbers<[1], [0], [0], [1], [0, 0, 1, 1], [], []>} : vector<8x128xf32>, vector<128x128xf32>, vector<8x128xf32> -> vector<8x128xf32>
    %c0_4 = arith.constant 0 : index
    %c0_5 = arith.constant 0 : index
    %6 = vector.load %arg4[%c0_4, %c0_5] : memref<1x128xf32, #tpu.memory_space<vmem>>, vector<1x128xf32>
    %7 = vector.broadcast %6 : vector<1x128xf32> to vector<8x128xf32>
    %8 = arith.addf %5, %7 : vector<8x128xf32>
    %cst_6 = arith.constant 0.000000e+00 : f32
    %9 = vector.broadcast %cst_6 : f32 to vector<8x128xf32>
    %10 = arith.maximumf %8, %9 : vector<8x128xf32>
    %c0_7 = arith.constant 0 : index
    %c0_8 = arith.constant 0 : index
    %11 = vector.load %arg10[%c0_7, %c0_8] : memref<8x128xf32, #tpu.memory_space<vmem>>, vector<8x128xf32>
    %c0_9 = arith.constant 0 : index
    %c0_10 = arith.constant 0 : index
    %12 = vector.load %arg5[%c0_9, %c0_10] : memref<128x128xf32, #tpu.memory_space<vmem>>, vector<128x128xf32>
    %cst_11 = arith.constant dense<0.000000e+00> : vector<8x128xf32>
    %13 = tpu.matmul %10, %12, %cst_11 {dimension_numbers = #tpu.dot_dimension_numbers<[1], [0], [0], [1], [0, 0, 1, 1], [], []>} : vector<8x128xf32>, vector<128x128xf32>, vector<8x128xf32> -> vector<8x128xf32>
    %14 = arith.addf %11, %13 : vector<8x128xf32>
    %c0_12 = arith.constant 0 : index
    %c0_13 = arith.constant 0 : index
    %15 = vector.load %arg10[%c0_12, %c0_13] : memref<8x128xf32, #tpu.memory_space<vmem>>, vector<8x128xf32>
    tpu.vector_store %arg10[%c0_12, %c0_13], %14 {strides = array<i32>} : memref<8x128xf32, #tpu.memory_space<vmem>>, vector<8x128xf32>,
    %c0_i32_14 = arith.constant 0 : i32
    %16 = arith.cmpi eq, %arg1, %c0_i32_14 : i32
    %17 = arith.extui %16 : i1 to i32
    %c0_i32_15 = arith.constant 0 : i32
    %18 = arith.cmpi ne, %17, %c0_i32_15 : i32
    scf.if %18 {
      %c0_16 = arith.constant 0 : index
      %c0_17 = arith.constant 0 : index
      %19 = vector.load %arg10[%c0_16, %c0_17] : memref<8x128xf32, #tpu.memory_space<vmem>>, vector<8x128xf32>
      %c0_18 = arith.constant 0 : index
      %c0_19 = arith.constant 0 : index
      %20 = vector.load %arg6[%c0_18, %c0_19] : memref<1x128xf32, #tpu.memory_space<vmem>>, vector<1x128xf32>
      %21 = vector.broadcast %20 : vector<1x128xf32> to vector<8x128xf32>
      %22 = arith.addf %19, %21 : vector<8x128xf32>
      %c0_20 = arith.constant 0 : index
      %c0_21 = arith.constant 0 : index
      %23 = vector.load %arg2[%c0_20, %c0_21] : memref<8x128xf32, #tpu.memory_space<vmem>>, vector<8x128xf32>
      %24 = arith.addf %23, %22 : vector<8x128xf32>
      %cst_22 = arith.constant dense<0.000000e+00> : vector<8xf32>
      %25 = vector.multi_reduction <add>, %24, %cst_22 [1] : vector<8x128xf32> to vector<8xf32>
      %26 = vector.shape_cast %25 : vector<8xf32> to vector<8x1xf32>
      %cst_23 = arith.constant 3.125000e-02 : f32
      %27 = vector.broadcast %cst_23 : f32 to vector<8x1xf32>
      %28 = arith.mulf %26, %27 : vector<8x1xf32>
      %29 = vector.broadcast %28 : vector<8x1xf32> to vector<8x128xf32>
      %30 = arith.subf %24, %29 : vector<8x128xf32>
      %31 = tpu.iota {dimensions = array<i32: 1>} : vector<8x128xi32>
      %c32_i32 = arith.constant 32 : i32
      %32 = vector.broadcast %c32_i32 : i32 to vector<8x128xi32>
      %33 = arith.cmpi slt, %31, %32 : vector<8x128xi32>
      %cst_24 = arith.constant 0.000000e+00 : f32
      %34 = vector.broadcast %cst_24 : f32 to vector<8x128xf32>
      %35 = arith.select %33, %30, %34 : vector<8x128xi1>, vector<8x128xf32>
      %36 = arith.mulf %35, %35 : vector<8x128xf32>
      %cst_25 = arith.constant dense<0.000000e+00> : vector<8xf32>
      %37 = vector.multi_reduction <add>, %36, %cst_25 [1] : vector<8x128xf32> to vector<8xf32>
      %38 = vector.shape_cast %37 : vector<8xf32> to vector<8x1xf32>
      %cst_26 = arith.constant 0.0322580636 : f32
      %39 = vector.broadcast %cst_26 : f32 to vector<8x1xf32>
      %40 = arith.mulf %38, %39 : vector<8x1xf32>
      %41 = math.sqrt %40 : vector<8x1xf32>
      %cst_27 = arith.constant 9.99999997E-7 : f32
      %42 = vector.broadcast %cst_27 : f32 to vector<8x1xf32>
      %43 = arith.addf %41, %42 : vector<8x1xf32>
      %44 = tpu.reciprocal %43 {approx = true} : vector<8x1xf32> -> vector<8x1xf32>
      %45 = arith.mulf %43, %44 : vector<8x1xf32>
      %cst_28 = arith.constant 2.000000e+00 : f32
      %46 = vector.broadcast %cst_28 : f32 to vector<8x1xf32>
      %47 = arith.subf %46, %45 : vector<8x1xf32>
      %48 = arith.mulf %44, %47 : vector<8x1xf32>
      %49 = arith.mulf %43, %48 : vector<8x1xf32>
      %cst_29 = arith.constant 2.000000e+00 : f32
      %50 = vector.broadcast %cst_29 : f32 to vector<8x1xf32>
      %51 = arith.subf %50, %49 : vector<8x1xf32>
      %52 = arith.mulf %48, %51 : vector<8x1xf32>
      %c0_30 = arith.constant 0 : index
      %c0_31 = arith.constant 0 : index
      %53 = vector.load %arg7[%c0_30, %c0_31] : memref<1x128xf32, #tpu.memory_space<vmem>>, vector<1x128xf32>
      %54 = vector.broadcast %52 : vector<8x1xf32> to vector<8x128xf32>
      %55 = arith.mulf %35, %54 : vector<8x128xf32>
      %56 = vector.broadcast %53 : vector<1x128xf32> to vector<8x128xf32>
      %57 = arith.mulf %56, %55 : vector<8x128xf32>
      %c0_32 = arith.constant 0 : index
      %c0_33 = arith.constant 0 : index
      %58 = vector.load %arg8[%c0_32, %c0_33] : memref<1x128xf32, #tpu.memory_space<vmem>>, vector<1x128xf32>
      %59 = vector.broadcast %58 : vector<1x128xf32> to vector<8x128xf32>
      %60 = arith.addf %57, %59 : vector<8x128xf32>
      %c0_34 = arith.constant 0 : index
      %c0_35 = arith.constant 0 : index
      %61 = vector.load %arg9[%c0_34, %c0_35] : memref<8x128xf32, #tpu.memory_space<vmem>>, vector<8x128xf32>
      tpu.vector_store %arg9[%c0_34, %c0_35], %60 {strides = array<i32>} : memref<8x128xf32, #tpu.memory_space<vmem>>, vector<8x128xf32>,
    } else {
    }
    return
  }
  func.func @transform_0(%arg0: i32, %arg1: i32) -> (i32, i32) {
    %c0_i32 = arith.constant 0 : i32
    %c0_i32_0 = arith.constant 0 : i32
    return %arg0, %c0_i32 : i32, i32
  }
  func.func @transform_1(%arg0: i32, %arg1: i32) -> (i32, i32) {
    %c0_i32 = arith.constant 0 : i32
    %c0_i32_0 = arith.constant 0 : i32
    return %c0_i32, %arg1 : i32, i32
  }
  func.func @transform_2(%arg0: i32, %arg1: i32) -> (i32, i32) {
    %c0_i32 = arith.constant 0 : i32
    %c0_i32_0 = arith.constant 0 : i32
    return %c0_i32, %arg1 : i32, i32
  }
  func.func @transform_3(%arg0: i32, %arg1: i32) -> (i32, i32) {
    %c0_i32 = arith.constant 0 : i32
    %c0_i32_0 = arith.constant 0 : i32
    return %arg1, %c0_i32 : i32, i32
  }
  func.func @transform_4(%arg0: i32, %arg1: i32) -> (i32, i32) {
    %c0_i32 = arith.constant 0 : i32
    %c0_i32_0 = arith.constant 0 : i32
    %c0_i32_1 = arith.constant 0 : i32
    return %c0_i32, %c0_i32_0 : i32, i32
  }
  func.func @transform_5(%arg0: i32, %arg1: i32) -> (i32, i32) {
    %c0_i32 = arith.constant 0 : i32
    %c0_i32_0 = arith.constant 0 : i32
    %c0_i32_1 = arith.constant 0 : i32
    return %c0_i32, %c0_i32_0 : i32, i32
  }
  func.func @transform_6(%arg0: i32, %arg1: i32) -> (i32, i32) {
    %c0_i32 = arith.constant 0 : i32
    %c0_i32_0 = arith.constant 0 : i32
    %c0_i32_1 = arith.constant 0 : i32
    return %c0_i32, %c0_i32_0 : i32, i32
  }
  func.func @transform_7(%arg0: i32, %arg1: i32) -> (i32, i32) {
    %c0_i32 = arith.constant 0 : i32
    %c0_i32_0 = arith.constant 0 : i32
    return %arg0, %c0_i32 : i32, i32
  }
}

</mosaic_0001>

<llo_original>
// kernel: tpu_custom_call.1
$region0: #{tpu_custom_call.1}
  #allocation0 [shape = 'u32[]', space=smem, size = 0x4, offset = 0x4, fixed_abs, tag = 'smem constant byte address 0x4 - core index']
  #allocation1 [shape = 'u32[144,128]{1,0:T(1,128)}', space=vmem, size = 0x12000, scoped, tag = 'internal scratch']
  #allocation2 [shape = 'f32[8,128]{1,0:T(8,128)}', space=vmem, size = 0x1000, scoped, tag = 'scratch operand']
  #allocation3 [shape = 'f32[8,128]{1,0:T(8,128)}', space=vmem, size = 0x1000, scoped, tag = 'scratch operand']
  %s0 = inlined_call_operand.hbm [shape: f32[16,128], index: 0, kind: input, shape index: {}]
  %s1 = inlined_call_operand.hbm [shape: f32[128,128], index: 1, kind: input, shape index: {}]
  %s2 = inlined_call_operand.vmem [shape: f32[1,128], index: 2, kind: input, shape index: {}]
  %s3 = inlined_call_operand.hbm [shape: f32[128,128], index: 3, kind: input, shape index: {}]
  %s4 = inlined_call_operand.vmem [shape: f32[1,128], index: 4, kind: input, shape index: {}]
  %s5 = inlined_call_operand.vmem [shape: f32[1,128], index: 5, kind: input, shape index: {}]
  %s6 = inlined_call_operand.vmem [shape: f32[1,128], index: 6, kind: input, shape index: {}]
  %s7 = inlined_call_operand.hbm [shape: f32[16,128], index: 7, kind: output, shape index: {}]
  %s8 = sld [smem:[#allocation0]]
  $region81: #{tpu_custom_call.1} parent=0
    _
  %s10 = ssub.s32 1, %s8
  %s11 = scalar_select 0, %s10, %s8
  $region1: #{tpu_custom_call.1} parent=0
    #allocation4 [shape = 'u8[8192]{0}', space=vmem, size = 0x2000, scoped, tag = 'input window, operand 0']
    #allocation5 [shape = 's32[2]{0}', space=sflag, size = 0x8, scoped, tag = 'scoped memory for tpu_custom_call.1']
    #allocation6 [shape = 's32[2]{0}', space=sflag, size = 0x8, scoped, tag = 'scoped memory for tpu_custom_call.1']
    #allocation7 [shape = 'u8[65536]{0}', space=vmem, size = 0x10000, scoped, tag = 'input window, operand 1, single buffered']
    #allocation8 [shape = 's32[1]{0}', space=sflag, size = 0x4, scoped, tag = 'scoped memory for tpu_custom_call.1']
    #allocation9 [shape = 'u8[65536]{0}', space=vmem, size = 0x10000, scoped, tag = 'input window, operand 3, single buffered']
    #allocation10 [shape = 'u8[8192]{0}', space=vmem, size = 0x2000, scoped, tag = 'output window, operand 0']
    %12 = vsyncpa [#allocation5], 0
    %s13 = scalar_lea.sflag [#allocation5], 1
    %14 = vsyncpa %s13, 0
    %15 = vsyncpa [#allocation8], 0
    %16 = vsyncpa [#allocation6], 0
    %s17 = scalar_lea.sflag [#allocation6], 1
    %18 = vsyncpa %s17, 0
    loop: start=0, step=1, limit=4
    $region2: #{tpu_custom_call.1} parent=1 // loop_pre_header
      _
    $region3: #{tpu_custom_call.1} parent=1 // loop_header
      %s20 = sphi 0, %s24
      %p21 = scmp.ge.s32.totalorder %s20, 4
      %s27 = sphi 0, %s39
      %s28 = sphi 0, %s35
      %s29 = sphi 0, %s27
      %s30 = sphi 0, %s28
      %s31 = sphi 0, %s29
      %s32 = sphi 0, %s30
      %s42 = sphi 0, %s44
      %s45 = sphi 0, %s42
      %s46 = sphi 0, %s45
      %s62 = sphi 0, %s46
      %s68 = sphi 0, %s70
      %s71 = sphi 0, %s68
      %s72 = sphi 0, %s71
      %s88 = sphi 0, %s72
      %s94 = sphi 0, %s96
      %s97 = sphi 0, %s94
      %s98 = sphi 0, %s97
      %s114 = sphi 0, %s98
      %s120 = sphi 0, %s122
      %s123 = sphi 0, %s120
      %s124 = sphi 0, %s123
      %s140 = sphi 0, %s124
      %s144 = sphi 0, %s144
      %s146 = sphi 0, %s144
      %s147 = sphi 0, %s146
      %s161 = sphi 0, %s147
      %s165 = sphi 0, %s165
      %s167 = sphi 0, %s165
      %s168 = sphi 0, %s167
      %s182 = sphi 0, %s168
      %s186 = sphi 0, %s186
      %s188 = sphi 0, %s186
      %s189 = sphi 0, %s188
      %s203 = sphi 0, %s189
      %s209 = sphi 0, %s211
      %s212 = sphi 0, %s209
      %s213 = sphi 0, %s212
      %s229 = sphi 0, %s213
    $region4: #{tpu_custom_call.1} parent=1 // loop_header_branch
      %23 = sbr.rel (%p21) target = $region8
    $region5: #{tpu_custom_call.1} parent=1 // loop_body
      %s25 = ssub.s32 %s20, 1
      %s26 = ssub.s32 %s20, 2
      %s33 = sadd.s32 1, %s28
      %p34 = scmp.ge.s32.totalorder %s33, 1
      %s35 = scalar_select %p34, 0, %s33
      %s36 = sadd.s32 1, %s27
      %s37 = scalar_select %p34, %s36, %s27
      %p38 = scmp.ge.s32.totalorder %s37, 2
      %s39 = scalar_select %p38, 0, %s37
      %s40 = ssub.s32 %s27, %s39
      %p41 = scmp.eq.s32.totalorder %s40, 0
      %s43 = sadd.s32 %s42, 1
      %s44 = scalar_select %p41, %s42, %s43
      %p47 = pneg %p41
      %p48 = scmp.eq.s32.totalorder %s20, 1
      %p49 = por %p47, %p48
      %p50 = scmp.ne.s32.totalorder %s42, %s45
      %p51 = scmp.eq.s32.totalorder %s20, 0
      %p52 = por %p50, %p51
      %p53 = scmp.ne.s32.totalorder %s42, %s45
      %p54 = scmp.eq.s32.totalorder %s25, 1
      %p55 = por %p53, %p54
      %p56 = scmp.ne.s32.totalorder %s45, %s46
      %p57 = scmp.eq.s32.totalorder %s25, 0
      %p58 = por %p56, %p57
      %p59 = scmp.ne.s32.totalorder %s45, %s46
      %p60 = scmp.eq.s32.totalorder %s26, 1
      %p61 = por %p59, %p60
      %p63 = scmp.ne.s32.totalorder %s46, %s62
      %p64 = scmp.eq.s32.totalorder %s26, 0
      %p65 = por %p63, %p64
      %s66 = ssub.s32 %s28, %s35
      %p67 = scmp.eq.s32.totalorder %s66, 0
      %s69 = sadd.s32 %s68, 1
      %s70 = scalar_select %p67, %s68, %s69
      %p73 = pneg %p67
      %p74 = scmp.eq.s32.totalorder %s20, 1
      %p75 = por %p73, %p74
      %p76 = scmp.ne.s32.totalorder %s68, %s71
      %p77 = scmp.eq.s32.totalorder %s20, 0
      %p78 = por %p76, %p77
      %p79 = scmp.ne.s32.totalorder %s68, %s71
      %p80 = scmp.eq.s32.totalorder %s25, 1
      %p81 = por %p79, %p80
      %p82 = scmp.ne.s32.totalorder %s71, %s72
      %p83 = scmp.eq.s32.totalorder %s25, 0
      %p84 = por %p82, %p83
      %p85 = scmp.ne.s32.totalorder %s71, %s72
      %p86 = scmp.eq.s32.totalorder %s26, 1
      %p87 = por %p85, %p86
      %p89 = scmp.ne.s32.totalorder %s72, %s88
      %p90 = scmp.eq.s32.totalorder %s26, 0
      %p91 = por %p89, %p90
      %s92 = ssub.s32 %s28, %s35
      %p93 = scmp.eq.s32.totalorder %s92, 0
      %s95 = sadd.s32 %s94, 1
      %s96 = scalar_select %p93, %s94, %s95
      %p99 = pneg %p93
      %p100 = scmp.eq.s32.totalorder %s20, 1
      %p101 = por %p99, %p100
      %p102 = scmp.ne.s32.totalorder %s94, %s97
      %p103 = scmp.eq.s32.totalorder %s20, 0
      %p104 = por %p102, %p103
      %p105 = scmp.ne.s32.totalorder %s94, %s97
      %p106 = scmp.eq.s32.totalorder %s25, 1
      %p107 = por %p105, %p106
      %p108 = scmp.ne.s32.totalorder %s97, %s98
      %p109 = scmp.eq.s32.totalorder %s25, 0
      %p110 = por %p108, %p109
      %p111 = scmp.ne.s32.totalorder %s97, %s98
      %p112 = scmp.eq.s32.totalorder %s26, 1
      %p113 = por %p111, %p112
      %p115 = scmp.ne.s32.totalorder %s98, %s114
      %p116 = scmp.eq.s32.totalorder %s26, 0
      %p117 = por %p115, %p116
      %s118 = ssub.s32 %s28, %s35
      %p119 = scmp.eq.s32.totalorder %s118, 0
      %s121 = sadd.s32 %s120, 1
      %s122 = scalar_select %p119, %s120, %s121
      %p125 = pneg %p119
      %p126 = scmp.eq.s32.totalorder %s20, 1
      %p127 = por %p125, %p126
      %p128 = scmp.ne.s32.totalorder %s120, %s123
      %p129 = scmp.eq.s32.totalorder %s20, 0
      %p130 = por %p128, %p129
      %p131 = scmp.ne.s32.totalorder %s120, %s123
      %p132 = scmp.eq.s32.totalorder %s25, 1
      %p133 = por %p131, %p132
      %p134 = scmp.ne.s32.totalorder %s123, %s124
      %p135 = scmp.eq.s32.totalorder %s25, 0
      %p136 = por %p134, %p135
      %p137 = scmp.ne.s32.totalorder %s123, %s124
      %p138 = scmp.eq.s32.totalorder %s26, 1
      %p139 = por %p137, %p138
      %p141 = scmp.ne.s32.totalorder %s124, %s140
      %p142 = scmp.eq.s32.totalorder %s26, 0
      %p143 = por %p141, %p142
      %s145 = sadd.s32 %s144, 1
      %p148 = scmp.eq.s32.totalorder %s20, 1
      %p149 = scmp.ne.s32.totalorder %s144, %s146
      %p150 = scmp.eq.s32.totalorder %s20, 0
      %p151 = por %p149, %p150
      %p152 = scmp.ne.s32.totalorder %s144, %s146
      %p153 = scmp.eq.s32.totalorder %s25, 1
      %p154 = por %p152, %p153
      %p155 = scmp.ne.s32.totalorder %s146, %s147
      %p156 = scmp.eq.s32.totalorder %s25, 0
      %p157 = por %p155, %p156
      %p158 = scmp.ne.s32.totalorder %s146, %s147
      %p159 = scmp.eq.s32.totalorder %s26, 1
      %p160 = por %p158, %p159
      %p162 = scmp.ne.s32.totalorder %s147, %s161
      %p163 = scmp.eq.s32.totalorder %s26, 0
      %p164 = por %p162, %p163
      %s166 = sadd.s32 %s165, 1
      %p169 = scmp.eq.s32.totalorder %s20, 1
      %p170 = scmp.ne.s32.totalorder %s165, %s167
      %p171 = scmp.eq.s32.totalorder %s20, 0
      %p172 = por %p170, %p171
      %p173 = scmp.ne.s32.totalorder %s165, %s167
      %p174 = scmp.eq.s32.totalorder %s25, 1
      %p175 = por %p173, %p174
      %p176 = scmp.ne.s32.totalorder %s167, %s168
      %p177 = scmp.eq.s32.totalorder %s25, 0
      %p178 = por %p176, %p177
      %p179 = scmp.ne.s32.totalorder %s167, %s168
      %p180 = scmp.eq.s32.totalorder %s26, 1
      %p181 = por %p179, %p180
      %p183 = scmp.ne.s32.totalorder %s168, %s182
      %p184 = scmp.eq.s32.totalorder %s26, 0
      %p185 = por %p183, %p184
      %s187 = sadd.s32 %s186, 1
      %p190 = scmp.eq.s32.totalorder %s20, 1
      %p191 = scmp.ne.s32.totalorder %s186, %s188
      %p192 = scmp.eq.s32.totalorder %s20, 0
      %p193 = por %p191, %p192
      %p194 = scmp.ne.s32.totalorder %s186, %s188
      %p195 = scmp.eq.s32.totalorder %s25, 1
      %p196 = por %p194, %p195
      %p197 = scmp.ne.s32.totalorder %s188, %s189
      %p198 = scmp.eq.s32.totalorder %s25, 0
      %p199 = por %p197, %p198
      %p200 = scmp.ne.s32.totalorder %s188, %s189
      %p201 = scmp.eq.s32.totalorder %s26, 1
      %p202 = por %p200, %p201
      %p204 = scmp.ne.s32.totalorder %s189, %s203
      %p205 = scmp.eq.s32.totalorder %s26, 0
      %p206 = por %p204, %p205
      %s207 = ssub.s32 %s27, %s39
      %p208 = scmp.eq.s32.totalorder %s207, 0
      %s210 = sadd.s32 %s209, 1
      %s211 = scalar_select %p208, %s209, %s210
      %p214 = pneg %p208
      %p215 = scmp.eq.s32.totalorder %s20, 1
      %p216 = por %p214, %p215
      %p217 = scmp.ne.s32.totalorder %s209, %s212
      %p218 = scmp.eq.s32.totalorder %s20, 0
      %p219 = por %p217, %p218
      %p220 = scmp.ne.s32.totalorder %s209, %s212
      %p221 = scmp.eq.s32.totalorder %s25, 1
      %p222 = por %p220, %p221
      %p223 = scmp.ne.s32.totalorder %s212, %s213
      %p224 = scmp.eq.s32.totalorder %s25, 0
      %p225 = por %p223, %p224
      %p226 = scmp.ne.s32.totalorder %s212, %s213
      %p227 = scmp.eq.s32.totalorder %s26, 1
      %p228 = por %p226, %p227
      %p230 = scmp.ne.s32.totalorder %s213, %s229
      %p231 = scmp.eq.s32.totalorder %s26, 0
      %p232 = por %p230, %p231
      %p233 = scmp.le.s32.totalorder 1, %s20
      %p234 = scmp.lt.s32.totalorder %s20, 3
      %p235 = pnand %p233, %p234
      %p236 = pneg %p235
      // Predicated region
      $region9: #{tpu_custom_call.1} parent=5 // pred_check
        _
      $region10: #{tpu_custom_call.1} parent=5 // pred_check_branch
        %238 = sbr.rel (%p235) target = $region12
      $region11: #{tpu_custom_call.1} parent=5 // pred_region
        %s239 = ssub.s32 %s20, 1
        // Predicated region
        $region13: #{tpu_custom_call.1} parent=11 // pred_check
          %p240 = pneg %p84
        $region14: #{tpu_custom_call.1} parent=11 // pred_check_branch
          %242 = sbr.rel (%p240) target = $region16
        $region15: #{tpu_custom_call.1} parent=11 // pred_region
          %s244 = ssub.s32 2048, 2048
          %245 = vsyncadd [#allocation8], %s244
          %s246 = smul.addr %s30, 128
          %s247 = scalar_lea.hbm %s1, %s246
          %s248 = sshll.u32 [#allocation7], 4
          %s249 = int_to_ptr.vmem [resolvable:$true] %s248
          %254 = dma.hbm_to_vmem [thread:$0]  %s247, 2048, %s249, [#allocation8], 128, 128, 8
        $region16: #{tpu_custom_call.1} parent=11 // pred_fallthru
          _
        // Predicated region
        $region17: #{tpu_custom_call.1} parent=11 // pred_check
          %p255 = pneg %p110
        $region18: #{tpu_custom_call.1} parent=11 // pred_check_branch
          %257 = sbr.rel (%p255) target = $region20
        $region19: #{tpu_custom_call.1} parent=11 // pred_region
          %p258 = scmp.lt.s32.totalorder %s30, 0
          %s259 = scalar_select %p258, %s30, 0
          %s260 = scalar_lea.vmem %s2, %s259
        $region20: #{tpu_custom_call.1} parent=11 // pred_fallthru
          _
        // Predicated region
        $region21: #{tpu_custom_call.1} parent=11 // pred_check
          %p261 = pneg %p136
        $region22: #{tpu_custom_call.1} parent=11 // pred_check_branch
          %263 = sbr.rel (%p261) target = $region24
        $region23: #{tpu_custom_call.1} parent=11 // pred_region
          %s264 = smul.u32 16, %s30
          %s266 = ssub.s32 2048, 2048
          %267 = vsyncadd [#allocation8], %s266
          %s268 = smul.addr %s264, 128
          %s269 = scalar_lea.hbm %s3, %s268
          %s270 = sshll.u32 [#allocation9], 4
          %s271 = int_to_ptr.vmem [resolvable:$true] %s270
          %276 = dma.hbm_to_vmem [thread:$0]  %s269, 2048, %s271, [#allocation8], 128, 128, 8
        $region24: #{tpu_custom_call.1} parent=11 // pred_fallthru
          _
        // Predicated region
        $region25: #{tpu_custom_call.1} parent=11 // pred_check
          %p277 = pneg %p157
        $region26: #{tpu_custom_call.1} parent=11 // pred_check_branch
          %279 = sbr.rel (%p277) target = $region28
        $region27: #{tpu_custom_call.1} parent=11 // pred_region
          _
        $region28: #{tpu_custom_call.1} parent=11 // pred_fallthru
          _
        // Predicated region
        $region29: #{tpu_custom_call.1} parent=11 // pred_check
          %p280 = pneg %p178
        $region30: #{tpu_custom_call.1} parent=11 // pred_check_branch
          %282 = sbr.rel (%p280) target = $region32
        $region31: #{tpu_custom_call.1} parent=11 // pred_region
          _
        $region32: #{tpu_custom_call.1} parent=11 // pred_fallthru
          _
        // Predicated region
        $region33: #{tpu_custom_call.1} parent=11 // pred_check
          %p283 = pneg %p199
        $region34: #{tpu_custom_call.1} parent=11 // pred_check_branch
          %285 = sbr.rel (%p283) target = $region36
        $region35: #{tpu_custom_call.1} parent=11 // pred_region
          _
        $region36: #{tpu_custom_call.1} parent=11 // pred_fallthru
          _
      $region12: #{tpu_custom_call.1} parent=5 // pred_fallthru
        _
      %p286 = scmp.lt.s32.totalorder %s20, 2
      // Predicated region
      $region37: #{tpu_custom_call.1} parent=5 // pred_check
        %p287 = pneg %p286
      $region38: #{tpu_custom_call.1} parent=5 // pred_check_branch
        %289 = sbr.rel (%p287) target = $region40
      $region39: #{tpu_custom_call.1} parent=5 // pred_region
        // Predicated region
        $region41: #{tpu_custom_call.1} parent=39 // pred_check
          %p290 = pneg %p52
        $region42: #{tpu_custom_call.1} parent=39 // pred_check_branch
          %292 = sbr.rel (%p290) target = $region44
        $region43: #{tpu_custom_call.1} parent=39 // pred_region
          %s293 = sand.u32 %s42, 1
          %s294 = scalar_lea.sflag [#allocation5], %s293
          %s295 = sand.u32 %s42, 1
          %s296 = smul.addr %s295, 8
          %s297 = scalar_lea.vmem [#allocation4], %s296
          %s299 = ssub.s32 128, 128
          %300 = vsyncadd %s294, %s299
          %s301 = smul.addr %s27, 128
          %s302 = scalar_lea.hbm %s0, %s301
          %s304 = sshll.u32 %s297, 4
          %s305 = int_to_ptr.vmem [resolvable:$true] %s304
          %307 = dma.hbm_to_vmem [thread:$0]  %s302, 128, %s305, %s294
        $region44: #{tpu_custom_call.1} parent=39 // pred_fallthru
          _
      $region40: #{tpu_custom_call.1} parent=5 // pred_fallthru
        _
      %p308 = scmp.le.s32.totalorder 1, %s20
      %p309 = scmp.lt.s32.totalorder %s20, 3
      %p310 = pnand %p308, %p309
      %p311 = pneg %p310
      // Predicated region
      $region45: #{tpu_custom_call.1} parent=5 // pred_check
        _
      $region46: #{tpu_custom_call.1} parent=5 // pred_check_branch
        %313 = sbr.rel (%p310) target = $region48
      $region47: #{tpu_custom_call.1} parent=5 // pred_region
        %s314 = ssub.s32 %s20, 1
        %s315 = sand.u32 %s45, 1
        %s316 = scalar_lea.sflag [#allocation5], %s315
        %s317 = sand.u32 %s45, 1
        %s318 = smul.addr %s317, 8
        %s319 = scalar_lea.vmem [#allocation4], %s318
        // Predicated region
        $region49: #{tpu_custom_call.1} parent=47 // pred_check
          %p320 = pneg %p58
        $region50: #{tpu_custom_call.1} parent=47 // pred_check_branch
          %322 = sbr.rel (%p320) target = $region52
        $region51: #{tpu_custom_call.1} parent=47 // pred_region
          %323 = dma.done %s316, 128
        $region52: #{tpu_custom_call.1} parent=47 // pred_fallthru
          _
        // Predicated region
        $region53: #{tpu_custom_call.1} parent=47 // pred_check
          %p324 = pneg %p84
        $region54: #{tpu_custom_call.1} parent=47 // pred_check_branch
          %326 = sbr.rel (%p324) target = $region56
        $region55: #{tpu_custom_call.1} parent=47 // pred_region
          %327 = dma.done [#allocation8], 2048
        $region56: #{tpu_custom_call.1} parent=47 // pred_fallthru
          _
        // Predicated region
        $region57: #{tpu_custom_call.1} parent=47 // pred_check
          %p328 = pneg %p136
        $region58: #{tpu_custom_call.1} parent=47 // pred_check_branch
          %330 = sbr.rel (%p328) target = $region60
        $region59: #{tpu_custom_call.1} parent=47 // pred_region
          %331 = dma.done [#allocation8], 2048
        $region60: #{tpu_custom_call.1} parent=47 // pred_fallthru
          _
        %s332 = sand.u32 %s45, 1
        %s333 = scalar_lea.sflag [#allocation5], %s332
        %s334 = sand.u32 %s45, 1
        %s335 = smul.addr %s334, 8
        %s336 = scalar_lea.vmem [#allocation4], %s335
        %p337 = pneg %p58
        %p338 = pneg %p55
        %p339 = pneg %p84
        %p340 = pneg %p81
        %p341 = scmp.lt.s32.totalorder %s30, 0
        %s342 = scalar_select %p341, %s30, 0
        %s343 = scalar_lea.vmem %s2, %s342
        %p344 = pneg %p110
        %p345 = pneg %p107
        %p346 = pneg %p136
        %p347 = pneg %p133
        %p348 = pneg %p157
        %p349 = pneg %p154
        %p350 = pneg %p178
        %p351 = pneg %p175
        %p352 = pneg %p199
        %p353 = pneg %p196
        %p354 = pneg %p225
        %p355 = pneg %p222
        %s356 = sand.u32 %s212, 1
        %s357 = scalar_lea.sflag [#allocation6], %s356
        %s358 = sand.u32 %s212, 1
        %s359 = smul.addr %s358, 8
        %s360 = scalar_lea.vmem [#allocation10], %s359
        %p361 = scmp.lt.s32.totalorder %s30, 0
        %s362 = scalar_select %p361, %s30, 0
        %s363 = scalar_lea.vmem %s2, %s362
        %s364 = smul.u32 16, %s30
        %p365 = scmp.eq.s32.totalorder %s30, 0
        // Predicated region
        $region61: #{tpu_custom_call.1} parent=47 // pred_check
          %p366 = pneg %p365
        $region62: #{tpu_custom_call.1} parent=47 // pred_check_branch
          %368 = sbr.rel (%p366) target = $region64
        $region63: #{tpu_custom_call.1} parent=47 // pred_region
          %369 = vst [vmem:[#allocation2] sm:$0xff] 0.0
          %v370 = vld [vmem:[%s319] sm:$0xff]
          %371 = vst [vmem:[#allocation3] sm:$0xff] %v370
        $region64: #{tpu_custom_call.1} parent=47 // pred_fallthru
          _
        %v372 = vld [vmem:[#allocation3] sm:$0xff]
        %v373 = vld [vmem:[#allocation7] sm:$0xff]
        %v374 = vld [vmem:[#allocation7 + $0x8] sm:$0xff]
        %v375 = vld [vmem:[#allocation7 + $0x10] sm:$0xff]
        %v376 = vld [vmem:[#allocation7 + $0x18] sm:$0xff]
        %v377 = vld [vmem:[#allocation7 + $0x20] sm:$0xff]
        %v378 = vld [vmem:[#allocation7 + $0x28] sm:$0xff]
        %v379 = vld [vmem:[#allocation7 + $0x30] sm:$0xff]
        %v380 = vld [vmem:[#allocation7 + $0x38] sm:$0xff]
        %v381 = vld [vmem:[#allocation7 + $0x40] sm:$0xff]
        %v382 = vld [vmem:[#allocation7 + $0x48] sm:$0xff]
        %v383 = vld [vmem:[#allocation7 + $0x50] sm:$0xff]
        %v384 = vld [vmem:[#allocation7 + $0x58] sm:$0xff]
        %v385 = vld [vmem:[#allocation7 + $0x60] sm:$0xff]
        %v386 = vld [vmem:[#allocation7 + $0x68] sm:$0xff]
        %v387 = vld [vmem:[#allocation7 + $0x70] sm:$0xff]
        %v388 = vld [vmem:[#allocation7 + $0x78] sm:$0xff]
        %v389 = vld [vmem:[%s363] sm:$0x1]
        %v391 = vlaneseq
        %v392 = vshrl.u32 %v391, 7
        %v393 = vsub.s32 0, %v392
        %v394 = vrot.slane %v389, %v393
        %396 = vmatprep.subr.mxu0 0.0
        %397 = vmatpush1.msra.mxu0 %v388
        %398 = vmatprep.subr.mxu0 0.0
        %399 = vmatpush1.msra.mxu0 %v387
        %400 = vmatprep.subr.mxu0 0.0
        %401 = vmatpush1.msra.mxu0 %v386
        %402 = vmatprep.subr.mxu0 0.0
        %403 = vmatpush1.msra.mxu0 %v385
        %404 = vmatprep.subr.mxu0 0.0
        %405 = vmatpush1.msra.mxu0 %v384
        %406 = vmatprep.subr.mxu0 0.0
        %407 = vmatpush1.msra.mxu0 %v383
        %408 = vmatprep.subr.mxu0 0.0
        %409 = vmatpush1.msra.mxu0 %v382
        %410 = vmatprep.subr.mxu0 0.0
        %411 = vmatpush1.msra.mxu0 %v381
        %412 = vmatprep.subr.mxu0 0.0
        %413 = vmatpush1.msra.mxu0 %v380
        %414 = vmatprep.subr.mxu0 0.0
        %415 = vmatpush1.msra.mxu0 %v379
        %416 = vmatprep.subr.mxu0 0.0
        %417 = vmatpush1.msra.mxu0 %v378
        %418 = vmatprep.subr.mxu0 0.0
        %419 = vmatpush1.msra.mxu0 %v377
        %420 = vmatprep.subr.mxu0 0.0
        %421 = vmatpush1.msra.mxu0 %v376
        %422 = vmatprep.subr.mxu0 0.0
        %423 = vmatpush1.msra.mxu0 %v375
        %424 = vmatprep.subr.mxu0 0.0
        %425 = vmatpush1.msra.mxu0 %v374
        %426 = vmatprep.subr.mxu0 0.0
        %427 = vmatpush1.msra.mxu0 %v373
        %428 = vmatprep.subr.mxu0 0.0
        %429 = vmatpush2.msra.mxu0 0.0
        %430 = vmatprep.subr.mxu0 0.0
        %431 = vmatpush2.msra.mxu0 0.0
        %432 = vmatprep.subr.mxu0 0.0
        %433 = vmatpush2.msra.mxu0 0.0
        %434 = vmatprep.subr.mxu0 0.0
        %435 = vmatpush2.msra.mxu0 0.0
        %436 = vmatprep.subr.mxu0 0.0
        %437 = vmatpush2.msra.mxu0 0.0
        %438 = vmatprep.subr.mxu0 0.0
        %439 = vmatpush2.msra.mxu0 0.0
        %440 = vmatprep.subr.mxu0 0.0
        %441 = vmatpush2.msra.mxu0 0.0
        %442 = vmatprep.subr.mxu0 0.0
        %443 = vmatpush2.msra.mxu0 0.0
        %444 = vmatprep.subr.mxu0 0.0
        %445 = vmatpush2.msra.mxu0 0.0
        %446 = vmatprep.subr.mxu0 0.0
        %447 = vmatpush2.msra.mxu0 0.0
        %448 = vmatprep.subr.mxu0 0.0
        %449 = vmatpush2.msra.mxu0 0.0
        %450 = vmatprep.subr.mxu0 0.0
        %451 = vmatpush2.msra.mxu0 0.0
        %452 = vmatprep.subr.mxu0 0.0
        %453 = vmatpush2.msra.mxu0 0.0
        %454 = vmatprep.subr.mxu0 0.0
        %455 = vmatpush2.msra.mxu0 0.0
        %456 = vmatprep.subr.mxu0 0.0
        %457 = vmatpush2.msra.mxu0 0.0
        %458 = vmatprep.subr.mxu0 0.0
        %459 = vmatpush2.msra.mxu0 0.0
        %460 = vmatprep.mubr.f32.mxu0 0.0
        %461 = vmatmul.mubr.f32.gmra.mxu0 %v372
        %v462 = vpop.f32.mrf.mxu0
        %v463 = vadd.f32 %v394, %v462
        %v464 = vpop.f32.mrf.mxu0
        %465 = vdwg.mxu0
        %v466 = vmax.f32 %v463, 0.0
        %v467 = vld [vmem:[#allocation2] sm:$0xff]
        %v468 = vld [vmem:[#allocation9] sm:$0xff]
        %v469 = vld [vmem:[#allocation9 + $0x8] sm:$0xff]
        %v470 = vld [vmem:[#allocation9 + $0x10] sm:$0xff]
        %v471 = vld [vmem:[#allocation9 + $0x18] sm:$0xff]
        %v472 = vld [vmem:[#allocation9 + $0x20] sm:$0xff]
        %v473 = vld [vmem:[#allocation9 + $0x28] sm:$0xff]
        %v474 = vld [vmem:[#allocation9 + $0x30] sm:$0xff]
        %v475 = vld [vmem:[#allocation9 + $0x38] sm:$0xff]
        %v476 = vld [vmem:[#allocation9 + $0x40] sm:$0xff]
        %v477 = vld [vmem:[#allocation9 + $0x48] sm:$0xff]
        %v478 = vld [vmem:[#allocation9 + $0x50] sm:$0xff]
        %v479 = vld [vmem:[#allocation9 + $0x58] sm:$0xff]
        %v480 = vld [vmem:[#allocation9 + $0x60] sm:$0xff]
        %v481 = vld [vmem:[#allocation9 + $0x68] sm:$0xff]
        %v482 = vld [vmem:[#allocation9 + $0x70] sm:$0xff]
        %v483 = vld [vmem:[#allocation9 + $0x78] sm:$0xff]
        %484 = vmatprep.subr.mxu0 0.0
        %485 = vmatpush1.msra.mxu0 %v483
        %486 = vmatprep.subr.mxu0 0.0
        %487 = vmatpush1.msra.mxu0 %v482
        %488 = vmatprep.subr.mxu0 0.0
        %489 = vmatpush1.msra.mxu0 %v481
        %490 = vmatprep.subr.mxu0 0.0
        %491 = vmatpush1.msra.mxu0 %v480
        %492 = vmatprep.subr.mxu0 0.0
        %493 = vmatpush1.msra.mxu0 %v479
        %494 = vmatprep.subr.mxu0 0.0
        %495 = vmatpush1.msra.mxu0 %v478
        %496 = vmatprep.subr.mxu0 0.0
        %497 = vmatpush1.msra.mxu0 %v477
        %498 = vmatprep.subr.mxu0 0.0
        %499 = vmatpush1.msra.mxu0 %v476
        %500 = vmatprep.subr.mxu0 0.0
        %501 = vmatpush1.msra.mxu0 %v475
        %502 = vmatprep.subr.mxu0 0.0
        %503 = vmatpush1.msra.mxu0 %v474
        %504 = vmatprep.subr.mxu0 0.0
        %505 = vmatpush1.msra.mxu0 %v473
        %506 = vmatprep.subr.mxu0 0.0
        %507 = vmatpush1.msra.mxu0 %v472
        %508 = vmatprep.subr.mxu0 0.0
        %509 = vmatpush1.msra.mxu0 %v471
        %510 = vmatprep.subr.mxu0 0.0
        %511 = vmatpush1.msra.mxu0 %v470
        %512 = vmatprep.subr.mxu0 0.0
        %513 = vmatpush1.msra.mxu0 %v469
        %514 = vmatprep.subr.mxu0 0.0
        %515 = vmatpush1.msra.mxu0 %v468
        %516 = vmatprep.subr.mxu0 0.0
        %517 = vmatpush2.msra.mxu0 0.0
        %518 = vmatprep.subr.mxu0 0.0
        %519 = vmatpush2.msra.mxu0 0.0
        %520 = vmatprep.subr.mxu0 0.0
        %521 = vmatpush2.msra.mxu0 0.0
        %522 = vmatprep.subr.mxu0 0.0
        %523 = vmatpush2.msra.mxu0 0.0
        %524 = vmatprep.subr.mxu0 0.0
        %525 = vmatpush2.msra.mxu0 0.0
        %526 = vmatprep.subr.mxu0 0.0
        %527 = vmatpush2.msra.mxu0 0.0
        %528 = vmatprep.subr.mxu0 0.0
        %529 = vmatpush2.msra.mxu0 0.0
        %530 = vmatprep.subr.mxu0 0.0
        %531 = vmatpush2.msra.mxu0 0.0
        %532 = vmatprep.subr.mxu0 0.0
        %533 = vmatpush2.msra.mxu0 0.0
        %534 = vmatprep.subr.mxu0 0.0
        %535 = vmatpush2.msra.mxu0 0.0
        %536 = vmatprep.subr.mxu0 0.0
        %537 = vmatpush2.msra.mxu0 0.0
        %538 = vmatprep.subr.mxu0 0.0
        %539 = vmatpush2.msra.mxu0 0.0
        %540 = vmatprep.subr.mxu0 0.0
        %541 = vmatpush2.msra.mxu0 0.0
        %542 = vmatprep.subr.mxu0 0.0
        %543 = vmatpush2.msra.mxu0 0.0
        %544 = vmatprep.subr.mxu0 0.0
        %545 = vmatpush2.msra.mxu0 0.0
        %546 = vmatprep.subr.mxu0 0.0
        %547 = vmatpush2.msra.mxu0 0.0
        %548 = vmatprep.mubr.f32.mxu0 0.0
        %549 = vmatmul.mubr.f32.gmra.mxu0 %v466
        %v550 = vpop.f32.mrf.mxu0
        %v551 = vadd.f32 0.0, %v550
        %v552 = vpop.f32.mrf.mxu0
        %553 = vdwg.mxu0
        %v554 = vadd.f32 %v467, %v551
        %555 = vst [vmem:[#allocation2] sm:$0xff] %v554
        // Predicated region
        $region65: #{tpu_custom_call.1} parent=47 // pred_check
          %p556 = pneg %p365
        $region66: #{tpu_custom_call.1} parent=47 // pred_check_branch
          %558 = sbr.rel (%p556) target = $region68
        $region67: #{tpu_custom_call.1} parent=47 // pred_region
          %v559 = vld [vmem:[#allocation2] sm:$0xff]
          %v560 = vld [vmem:[%s4] sm:$0x1]
          %v562 = vlaneseq
          %v563 = vshrl.u32 %v562, 7
          %v564 = vsub.s32 0, %v563
          %v565 = vrot.slane %v560, %v564
          %v567 = vadd.f32 %v559, %v565
          %v568 = vld [vmem:[%s319] sm:$0xff]
          %v569 = vadd.f32 %v568, %v567
          %570 = vadd.xlane.f32.xlu0 %v569
          %v571 = vpop.xlane.xlu0 %570
          %v572 = vmul.f32 %v571, 0.03125
          %v573 = vsub.f32 %v569, %v572
          %v574 = vlaneseq
          %v575 = vand.u32 %v574, 127
          %vm576 = vcmp.lt.s32.totalorder %v575, 32
          %v577 = vsel %vm576, %v573, 0.0
          %v578 = vmul.f32 %v577, %v577
          %579 = vadd.xlane.f32.xlu0 %v578
          %v580 = vpop.xlane.xlu0 %579
          %v581 = vmul.f32 %v580, 0.032258064
          %v582 = vrsqrt.pop %v581
          %v583 = vmul.f32 %v581, %v582
          %vm584 = vcmp.eq.f32.partialorder %v581, inf
          %v585 = vsel %vm584, %v581, %v583
          %vm586 = vcmp.eq.f32.partialorder %v581, 0.0
          %v587 = vand.u32 %v581, 2147483648
          %v588 = vsel %vm586, %v587, %v585
          %v589 = vadd.f32 %v588, 1e-06
          %v590 = vrcp.pop %v589
          %v591 = vmul.f32 %v589, %v590
          %v592 = vsub.f32 2.0, %v591
          %v593 = vmul.f32 %v590, %v592
          %v594 = vmul.f32 %v589, %v593
          %v595 = vsub.f32 2.0, %v594
          %v596 = vmul.f32 %v593, %v595
          %v597 = vld [vmem:[%s5] sm:$0x1]
          %v598 = vmul.f32 %v577, %v596
          %v600 = vlaneseq
          %v601 = vshrl.u32 %v600, 7
          %v602 = vsub.s32 0, %v601
          %v603 = vrot.slane %v597, %v602
          %v605 = vmul.f32 %v603, %v598
          %v606 = vld [vmem:[%s6] sm:$0x1]
          %v608 = vlaneseq
          %v609 = vshrl.u32 %v608, 7
          %v610 = vsub.s32 0, %v609
          %v611 = vrot.slane %v606, %v610
          %v613 = vadd.f32 %v605, %v611
          %614 = vst [vmem:[%s360] sm:$0xff] %v613
        $region68: #{tpu_custom_call.1} parent=47 // pred_fallthru
          _
        %s615 = sand.u32 %s212, 1
        %s616 = scalar_lea.sflag [#allocation6], %s615
        %s617 = sand.u32 %s212, 1
        %s618 = smul.addr %s617, 8
        %s619 = scalar_lea.vmem [#allocation10], %s618
        // Predicated region
        $region69: #{tpu_custom_call.1} parent=47 // pred_check
          %p620 = pneg %p222
        $region70: #{tpu_custom_call.1} parent=47 // pred_check_branch
          %622 = sbr.rel (%p620) target = $region72
        $region71: #{tpu_custom_call.1} parent=47 // pred_region
          %s624 = ssub.s32 128, 128
          %625 = vsyncadd %s616, %s624
          %s626 = smul.addr %s29, 128
          %s627 = scalar_lea.hbm %s7, %s626
          %s629 = sshll.u32 %s619, 4
          %s630 = int_to_ptr.vmem [resolvable:$true] %s629
          %632 = dma.vmem_to_hbm [thread:$0]  %s630, 128, %s627, %s616
        $region72: #{tpu_custom_call.1} parent=47 // pred_fallthru
          _
      $region48: #{tpu_custom_call.1} parent=5 // pred_fallthru
        _
      %p633 = scmp.le.s32.totalorder 2, %s20
      // Predicated region
      $region73: #{tpu_custom_call.1} parent=5 // pred_check
        %p634 = pneg %p633
      $region74: #{tpu_custom_call.1} parent=5 // pred_check_branch
        %636 = sbr.rel (%p634) target = $region76
      $region75: #{tpu_custom_call.1} parent=5 // pred_region
        %s637 = ssub.s32 %s20, 2
        // Predicated region
        $region77: #{tpu_custom_call.1} parent=75 // pred_check
          %p638 = pneg %p228
        $region78: #{tpu_custom_call.1} parent=75 // pred_check_branch
          %640 = sbr.rel (%p638) target = $region80
        $region79: #{tpu_custom_call.1} parent=75 // pred_region
          %s641 = sand.u32 %s213, 1
          %s642 = scalar_lea.sflag [#allocation6], %s641
          %s643 = sand.u32 %s213, 1
          %s644 = smul.addr %s643, 8
          %s645 = scalar_lea.vmem [#allocation10], %s644
          %646 = dma.done %s642, 128
        $region80: #{tpu_custom_call.1} parent=75 // pred_fallthru
          _
      $region76: #{tpu_custom_call.1} parent=5 // pred_fallthru
        _
    $region6: #{tpu_custom_call.1} parent=1 // loop_footer
      %s24 = sadd.s32 1, %s20
    $region7: #{tpu_custom_call.1} parent=1 // loop_footer_branch
      %19 = sbr.rel target = $region3
    $region8: #{tpu_custom_call.1} parent=1 // loop_exit
      _
    %647 = vsyncpa [#allocation5], 1
    %s648 = scalar_lea.sflag [#allocation5], 1
    %649 = vsyncpa %s648, 1
    %650 = vsyncpa [#allocation8], 1
    %651 = vsyncpa [#allocation6], 1
    %s652 = scalar_lea.sflag [#allocation6], 1
    %653 = vsyncpa %s652, 1

</llo_original>
